<compile_context>
chip_gen: v7x
topology: tpu7x:2x2x1
jax: 0.10.0
libtpu: 0.0.40
codegen_flags: <defaults>
</compile_context>

<pallas_src>
import math

import jax
import jax.numpy as jnp
from jax.experimental import pallas as pl
from jax.experimental.pallas import tpu as pltpu


def _round_up(v, m):
    return (v + m - 1) // m * m


def _cdiv(a, b):
    return (a + b - 1) // b


def _pad_feature(d):
    """Lane-dense (128-mult) padding; bump to a 256 multiple only if the extra
    columns are <= 12.5% of the dim (cheap on v6e/v7x 2x256^2 MXUs)."""
    p = _round_up(d, 128)
    p256 = _round_up(d, 256)
    if p256 > p and (p256 - p) * 8 <= p256:
        p = p256
    return p


def _pick_hidden_tile(total, target):
    """Largest multiple of 128 <= target that divides `total` (a 128-mult)."""
    if total <= target:
        return total
    for cand in range(target - target % 128, 127, -128):
        if total % cand == 0:
            return cand
    return 128


def mlp_kernel(x_ref, w1_ref, b1_ref, w2_ref, b2_ref, o_ref, acc_ref):
    k = pl.program_id(1)

    @pl.when(k == 0)
    def _init():
        acc_ref[...] = jnp.zeros_like(acc_ref)

    # fc1 slice: cast activations to bf16 on the VPU (hidden under the MXU);
    # f32 accumulation via preferred_element_type.
    h = jnp.dot(x_ref[...].astype(jnp.bfloat16), w1_ref[...],
                preferred_element_type=jnp.float32)
    # Bias + tanh GELU: tanh goes to the EUP slot (vs. a VALU erf polynomial);
    # bf16 halves VALU/EUP work on v6e/v7x and is needed for the fc2 MXU anyway.
    h = jax.nn.gelu((h + b1_ref[...]).astype(jnp.bfloat16), approximate=True)
    # TODO(synk): dropout with p > 0 (training mode) not implemented; the
    # module's default drop=0.0 makes it an identity in the forward pass.
    acc_ref[...] += jnp.dot(h, w2_ref[...], preferred_element_type=jnp.float32)

    @pl.when(k == pl.num_programs(1) - 1)
    def _finalize():
        o_ref[...] = (acc_ref[...] + b2_ref[...]).astype(o_ref.dtype)


def prepare_mlp_params(w1, b1, w2, b2):
    """Pad + bf16-cast the weights once (hoisted out of the per-call path)."""
    C, H = w1.shape
    H2, Co = w2.shape
    assert H2 == H
    Cp, Hp, Cop = _pad_feature(C), _pad_feature(H), _pad_feature(Co)
    w1p = jnp.pad(w1.astype(jnp.bfloat16), ((0, Cp - C), (0, Hp - H)))
    w2p = jnp.pad(w2.astype(jnp.bfloat16), ((0, Hp - H), (0, Cop - Co)))
    b1p = jnp.pad(b1.astype(jnp.float32), (0, Hp - H)).reshape(1, Hp)
    b2p = jnp.pad(b2.astype(jnp.float32), (0, Cop - Co)).reshape(1, Cop)
    return dict(w1=w1p, b1=b1p, w2=w2p, b2=b2p,
                dims=(C, H, Co), padded=(Cp, Hp, Cop))


def mlp_pallas(x, params, *, block_rows=256, block_hidden=512):
    """x: (..., C_in); params: output of prepare_mlp_params."""
    C, H, Co = params["dims"]
    Cp, Hp, Cop = params["padded"]
    assert x.shape[-1] == C
    orig_dtype = x.dtype
    lead = x.shape[:-1]
    M = math.prod(lead) if lead else 1

    # Row tile: multiple of 16 (sublane packing); guarantee >= 2 row steps when
    # possible so both v7x TensorCores get work on the "parallel" axis.
    TM = min(block_rows, _round_up(M, 16))
    if M > 16 and _cdiv(M, TM) < 2:
        TM = max(16, _round_up(_cdiv(M, 2), 16))
    Mp = _round_up(M, TM)

    # Hidden tile: bounds VMEM to weight slices + a (TM, Cop) accumulator
    # instead of both full weight matrices + the full (TM, Hp) intermediate.
    TH = _pick_hidden_tile(Hp, block_hidden)
    n_h = Hp // TH

    x2 = x.reshape(M, C)
    if (Mp, Cp) != (M, C):
        # Zero padding is mathematically inert for Linear + GELU + Linear.
        x2 = jnp.pad(x2, ((0, Mp - M), (0, Cp - C)))

    # Single-buffer specs whose block index never changes: double-buffering a
    # constant block is pure VMEM waste.
    def _spec(shape, index_map, single_buffer):
        if single_buffer:
            return pl.BlockSpec(shape, index_map, pipeline_mode=pl.Buffered(1))
        return pl.BlockSpec(shape, index_map)

    const_w = n_h == 1  # weight slices are grid-constant only if H isn't tiled

    in_specs = [
        pl.BlockSpec((TM, Cp), lambda i, k: (i, 0)),          # x row tile
        _spec((Cp, TH), lambda i, k: (0, k), const_w),        # W1 column slice
        _spec((1, TH), lambda i, k: (0, k), const_w),         # b1 slice
        _spec((TH, Cop), lambda i, k: (k, 0), const_w),       # W2 row slice
        _spec((1, Cop), lambda i, k: (0, 0), True),           # b2 (grid-constant)
    ]
    out_specs = pl.BlockSpec((TM, Cop), lambda i, k: (i, 0))

    # VMEM budget: double-buffered x/out tiles, (single|double)-buffered weight
    # slices, f32 accumulator, plus the (TM, TH) fc1 intermediate, + headroom.
    x_bytes = jnp.dtype(x.dtype).itemsize
    o_bytes = jnp.dtype(orig_dtype).itemsize
    n_w = 1 if const_w else 2
    budget = (2 * TM * Cp * x_bytes
              + 2 * TM * Cop * o_bytes
              + n_w * (Cp * TH + TH * Cop) * 2
              + n_w * TH * 4 + Cop * 4
              + TM * Cop * 4           # accumulator scratch
              + TM * TH * 4)           # fc1 intermediate / spill headroom
    vmem_limit = int(min(max(budget * 3 // 2, 32 << 20), 64 << 20))

    out = pl.pallas_call(
        mlp_kernel,
        out_shape=jax.ShapeDtypeStruct((Mp, Cop), orig_dtype),
        grid_spec=pltpu.PrefetchScalarGridSpec(
            num_scalar_prefetch=0,
            grid=(Mp // TM, n_h),
            in_specs=in_specs,
            out_specs=out_specs,
            scratch_shapes=[pltpu.VMEM((TM, Cop), jnp.float32)],
        ),
        compiler_params=pltpu.CompilerParams(
            dimension_semantics=("parallel", "arbitrary"),
            vmem_limit_bytes=vmem_limit,
        ),
    )(x2, params["w1"], params["b1"], params["w2"], params["b2"])

    return out[:M, :Co].reshape(*lead, Co)


def mlp_forward(x, w1, b1, w2, b2, **kw):
    return mlp_pallas(x, prepare_mlp_params(w1, b1, w2, b2), **kw)


def mlp_ref(x, w1, b1, w2, b2):
    # Pure-JAX f32 reference mirroring the PyTorch forward (exact GELU,
    # drop=0.0 -> identity).
    h = jax.nn.gelu(x @ w1 + b1, approximate=False)
    return h @ w2 + b2


if __name__ == "__main__":
    key = jax.random.PRNGKey(0)

    def run_case(B, N, C_in, hidden, C_out, **kw):
        ks = jax.random.split(key, 5)
        x = jax.random.normal(ks[0], (B, N, C_in), dtype=jnp.float32)
        w1 = jax.random.normal(ks[1], (C_in, hidden), dtype=jnp.float32) * 0.05
        b1 = jax.random.normal(ks[2], (hidden,), dtype=jnp.float32) * 0.05
        w2 = jax.random.normal(ks[3], (hidden, C_out), dtype=jnp.float32) * 0.05
        b2 = jax.random.normal(ks[4], (C_out,), dtype=jnp.float32) * 0.05

        params = prepare_mlp_params(w1, b1, w2, b2)  # hoisted pad/cast
        out = mlp_pallas(x, params, **kw)
        jax.block_until_ready(out)

        ref = mlp_ref(x, w1, b1, w2, b2)
        assert out.shape == ref.shape
        # bf16 MXU operands + tanh GELU vs. f32 erf reference.
        assert jnp.allclose(out, ref, atol=2e-2, rtol=2e-2), "mismatch vs reference"

    # Small lane-friendly case: M = 2*64 = 128 rows -> 2 parallel 64-row tiles,
    # single hidden step (exercises the single-buffered constant-weight path).
    run_case(2, 64, 96, 384, 96)
    # Exercises row/feature zero-padding and the hidden-axis accumulate path
    # (Hp = 384 tiled as 3 x 128 with the f32 scratch accumulator).
    run_case(2, 50, 72, 384, 136, block_hidden=128)

    print("KERNEL_OK")
</pallas_src>

<mosaic_0001>
module attributes {stable_mosaic.version = 11 : i64} {
  func.func @mlp_kernel(%arg0: i32, %arg1: i32, %arg2: memref<64x128xf32, #tpu.memory_space<vmem>>, %arg3: memref<128x384xbf16, #tpu.memory_space<vmem>>, %arg4: memref<1x384xf32, #tpu.memory_space<vmem>>, %arg5: memref<384x128xbf16, #tpu.memory_space<vmem>>, %arg6: memref<1x128xf32, #tpu.memory_space<vmem>>, %arg7: memref<64x128xf32, #tpu.memory_space<vmem>>, %arg8: memref<64x128xf32, #tpu.memory_space<vmem>>) attributes {dimension_semantics = [#tpu.dimension_semantics<parallel>, #tpu.dimension_semantics<arbitrary>], iteration_bounds = array<i64: 2, 1>, scalar_prefetch = 0 : i64, scratch_operands = 1 : i64, tpu.core_type = #tpu.core_type<tc>, window_params = [{transform_indices = @transform_0, window_bounds = array<i64: 64, 128>}, {pipeline_mode = #tpu.pipeline_mode<synchronous>, transform_indices = @transform_1, window_bounds = array<i64: 128, 384>}, {pipeline_mode = #tpu.pipeline_mode<synchronous>, transform_indices = @transform_2, window_bounds = array<i64: 1, 384>}, {pipeline_mode = #tpu.pipeline_mode<synchronous>, transform_indices = @transform_3, window_bounds = array<i64: 384, 128>}, {pipeline_mode = #tpu.pipeline_mode<synchronous>, transform_indices = @transform_4, window_bounds = array<i64: 1, 128>}, {transform_indices = @transform_5, window_bounds = array<i64: 64, 128>}]} {
    %c0_i32 = arith.constant 0 : i32
    %0 = arith.cmpi eq, %arg1, %c0_i32 : i32
    %1 = arith.extui %0 : i1 to i32
    %c0_i32_0 = arith.constant 0 : i32
    %2 = arith.cmpi ne, %1, %c0_i32_0 : i32
    scf.if %2 {
      %cst_19 = arith.constant 0.000000e+00 : f32
      %32 = vector.broadcast %cst_19 : f32 to vector<64x128xf32>
      %c0_20 = arith.constant 0 : index
      %c0_21 = arith.constant 0 : index
      %33 = vector.load %arg8[%c0_20, %c0_21] : memref<64x128xf32, #tpu.memory_space<vmem>>, vector<64x128xf32>
      tpu.vector_store %arg8[%c0_20, %c0_21], %32 {strides = array<i32>} : memref<64x128xf32, #tpu.memory_space<vmem>>, vector<64x128xf32>,
    } else {
    }
    %c0 = arith.constant 0 : index
    %c0_1 = arith.constant 0 : index
    %3 = vector.load %arg2[%c0, %c0_1] : memref<64x128xf32, #tpu.memory_space<vmem>>, vector<64x128xf32>
    %4 = arith.truncf %3 : vector<64x128xf32> to vector<64x128xbf16>
    %c0_2 = arith.constant 0 : index
    %c0_3 = arith.constant 0 : index
    %5 = vector.load %arg3[%c0_2, %c0_3] : memref<128x384xbf16, #tpu.memory_space<vmem>>, vector<128x384xbf16>
    %cst = arith.constant dense<0.000000e+00> : vector<64x384xf32>
    %6 = tpu.matmul %4, %5, %cst {dimension_numbers = #tpu.dot_dimension_numbers<[1], [0], [0], [1], [0, 0, 1, 1], [], []>} : vector<64x128xbf16>, vector<128x384xbf16>, vector<64x384xf32> -> vector<64x384xf32>
    %c0_4 = arith.constant 0 : index
    %c0_5 = arith.constant 0 : index
    %7 = vector.load %arg4[%c0_4, %c0_5] : memref<1x384xf32, #tpu.memory_space<vmem>>, vector<1x384xf32>
    %8 = vector.broadcast %7 : vector<1x384xf32> to vector<64x384xf32>
    %9 = arith.addf %6, %8 : vector<64x384xf32>
    %10 = arith.truncf %9 : vector<64x384xf32> to vector<64x384xbf16>
    %11 = arith.mulf %10, %10 : vector<64x384xbf16>
    %12 = arith.mulf %10, %11 : vector<64x384xbf16>
    %cst_6 = arith.constant 4.467770e-02 : bf16
    %13 = vector.broadcast %cst_6 : bf16 to vector<64x384xbf16>
    %14 = arith.mulf %13, %12 : vector<64x384xbf16>
    %15 = arith.addf %10, %14 : vector<64x384xbf16>
    %cst_7 = arith.constant 7.968750e-01 : bf16
    %16 = vector.broadcast %cst_7 : bf16 to vector<64x384xbf16>
    %17 = arith.mulf %16, %15 : vector<64x384xbf16>
    %18 = math.tanh %17 : vector<64x384xbf16>
    %cst_8 = arith.constant 1.000000e+00 : bf16
    %19 = vector.broadcast %cst_8 : bf16 to vector<64x384xbf16>
    %20 = arith.addf %19, %18 : vector<64x384xbf16>
    %cst_9 = arith.constant 5.000000e-01 : bf16
    %21 = vector.broadcast %cst_9 : bf16 to vector<64x384xbf16>
    %22 = arith.mulf %21, %20 : vector<64x384xbf16>
    %23 = arith.mulf %10, %22 : vector<64x384xbf16>
    %c0_10 = arith.constant 0 : index
    %c0_11 = arith.constant 0 : index
    %24 = vector.load %arg8[%c0_10, %c0_11] : memref<64x128xf32, #tpu.memory_space<vmem>>, vector<64x128xf32>
    %c0_12 = arith.constant 0 : index
    %c0_13 = arith.constant 0 : index
    %25 = vector.load %arg5[%c0_12, %c0_13] : memref<384x128xbf16, #tpu.memory_space<vmem>>, vector<384x128xbf16>
    %cst_14 = arith.constant dense<0.000000e+00> : vector<64x128xf32>
    %26 = tpu.matmul %23, %25, %cst_14 {dimension_numbers = #tpu.dot_dimension_numbers<[1], [0], [0], [1], [0, 0, 1, 1], [], []>} : vector<64x384xbf16>, vector<384x128xbf16>, vector<64x128xf32> -> vector<64x128xf32>
    %27 = arith.addf %24, %26 : vector<64x128xf32>
    %c0_15 = arith.constant 0 : index
    %c0_16 = arith.constant 0 : index
    %28 = vector.load %arg8[%c0_15, %c0_16] : memref<64x128xf32, #tpu.memory_space<vmem>>, vector<64x128xf32>
    tpu.vector_store %arg8[%c0_15, %c0_16], %27 {strides = array<i32>} : memref<64x128xf32, #tpu.memory_space<vmem>>, vector<64x128xf32>,
    %c0_i32_17 = arith.constant 0 : i32
    %29 = arith.cmpi eq, %arg1, %c0_i32_17 : i32
    %30 = arith.extui %29 : i1 to i32
    %c0_i32_18 = arith.constant 0 : i32
    %31 = arith.cmpi ne, %30, %c0_i32_18 : i32
    scf.if %31 {
      %c0_19 = arith.constant 0 : index
      %c0_20 = arith.constant 0 : index
      %32 = vector.load %arg8[%c0_19, %c0_20] : memref<64x128xf32, #tpu.memory_space<vmem>>, vector<64x128xf32>
      %c0_21 = arith.constant 0 : index
      %c0_22 = arith.constant 0 : index
      %33 = vector.load %arg6[%c0_21, %c0_22] : memref<1x128xf32, #tpu.memory_space<vmem>>, vector<1x128xf32>
      %34 = vector.broadcast %33 : vector<1x128xf32> to vector<64x128xf32>
      %35 = arith.addf %32, %34 : vector<64x128xf32>
      %c0_23 = arith.constant 0 : index
      %c0_24 = arith.constant 0 : index
      %36 = vector.load %arg7[%c0_23, %c0_24] : memref<64x128xf32, #tpu.memory_space<vmem>>, vector<64x128xf32>
      tpu.vector_store %arg7[%c0_23, %c0_24], %35 {strides = array<i32>} : memref<64x128xf32, #tpu.memory_space<vmem>>, vector<64x128xf32>,
    } else {
    }
    return
  }
  func.func @transform_0(%arg0: i32, %arg1: i32) -> (i32, i32) {
    %c0_i32 = arith.constant 0 : i32
    %c0_i32_0 = arith.constant 0 : i32
    return %arg0, %c0_i32 : i32, i32
  }
  func.func @transform_1(%arg0: i32, %arg1: i32) -> (i32, i32) {
    %c0_i32 = arith.constant 0 : i32
    %c0_i32_0 = arith.constant 0 : i32
    return %c0_i32, %arg1 : i32, i32
  }
  func.func @transform_2(%arg0: i32, %arg1: i32) -> (i32, i32) {
    %c0_i32 = arith.constant 0 : i32
    %c0_i32_0 = arith.constant 0 : i32
    return %c0_i32, %arg1 : i32, i32
  }
  func.func @transform_3(%arg0: i32, %arg1: i32) -> (i32, i32) {
    %c0_i32 = arith.constant 0 : i32
    %c0_i32_0 = arith.constant 0 : i32
    return %arg1, %c0_i32 : i32, i32
  }
  func.func @transform_4(%arg0: i32, %arg1: i32) -> (i32, i32) {
    %c0_i32 = arith.constant 0 : i32
    %c0_i32_0 = arith.constant 0 : i32
    %c0_i32_1 = arith.constant 0 : i32
    return %c0_i32, %c0_i32_0 : i32, i32
  }
  func.func @transform_5(%arg0: i32, %arg1: i32) -> (i32, i32) {
    %c0_i32 = arith.constant 0 : i32
    %c0_i32_0 = arith.constant 0 : i32
    return %arg0, %c0_i32 : i32, i32
  }
}

</mosaic_0001>

<llo_original>
// kernel: tpu_custom_call.1
$region0: #{tpu_custom_call.1}
  #allocation0 [shape = 'u32[]', space=smem, size = 0x4, offset = 0x4, fixed_abs, tag = 'smem constant byte address 0x4 - core index']
  #allocation1 [shape = 'u32[144,128]{1,0:T(1,128)}', space=vmem, size = 0x12000, scoped, tag = 'internal scratch']
  #allocation2 [shape = 'f32[64,128]{1,0:T(8,128)}', space=vmem, size = 0x8000, scoped, tag = 'scratch operand']
  %s0 = inlined_call_operand.hbm [shape: f32[128,128], index: 0, kind: input, shape index: {}]
  %s1 = inlined_call_operand.hbm [shape: bf16[128,384], index: 1, kind: input, shape index: {}]
  %s2 = inlined_call_operand.vmem [shape: f32[1,384], index: 2, kind: input, shape index: {}]
  %s3 = inlined_call_operand.hbm [shape: bf16[384,128], index: 3, kind: input, shape index: {}]
  %s4 = inlined_call_operand.vmem [shape: f32[1,128], index: 4, kind: input, shape index: {}]
  %s5 = inlined_call_operand.hbm [shape: f32[128,128], index: 5, kind: output, shape index: {}]
  %s6 = sld [smem:[#allocation0]]
  $region73: #{tpu_custom_call.1} parent=0
    _
  %s8 = ssub.s32 1, %s6
  %s9 = scalar_select 0, %s8, %s6
  $region1: #{tpu_custom_call.1} parent=0
    #allocation3 [shape = 'u8[65536]{0}', space=vmem, size = 0x10000, scoped, tag = 'input window, operand 0']
    #allocation4 [shape = 's32[2]{0}', space=sflag, size = 0x8, scoped, tag = 'scoped memory for tpu_custom_call.1']
    #allocation5 [shape = 's32[2]{0}', space=sflag, size = 0x8, scoped, tag = 'scoped memory for tpu_custom_call.1']
    #allocation6 [shape = 'u8[98304]{0}', space=vmem, size = 0x18000, scoped, tag = 'input window, operand 1, single buffered']
    #allocation7 [shape = 's32[1]{0}', space=sflag, size = 0x4, scoped, tag = 'scoped memory for tpu_custom_call.1']
    #allocation8 [shape = 'u8[98304]{0}', space=vmem, size = 0x18000, scoped, tag = 'input window, operand 3, single buffered']
    #allocation9 [shape = 'u8[65536]{0}', space=vmem, size = 0x10000, scoped, tag = 'output window, operand 0']
    %10 = vsyncpa [#allocation4], 0
    %s11 = scalar_lea.sflag [#allocation4], 1
    %12 = vsyncpa %s11, 0
    %13 = vsyncpa [#allocation7], 0
    %14 = vsyncpa [#allocation5], 0
    %s15 = scalar_lea.sflag [#allocation5], 1
    %16 = vsyncpa %s15, 0
    loop: start=0, step=1, limit=4
    $region2: #{tpu_custom_call.1} parent=1 // loop_pre_header
      _
    $region3: #{tpu_custom_call.1} parent=1 // loop_header
      %s18 = sphi 0, %s22
      %p19 = scmp.ge.s32.totalorder %s18, 4
      %s25 = sphi 0, %s37
      %s26 = sphi 0, %s33
      %s27 = sphi 0, %s25
      %s28 = sphi 0, %s26
      %s29 = sphi 0, %s27
      %s30 = sphi 0, %s28
      %s40 = sphi 0, %s42
      %s43 = sphi 0, %s40
      %s44 = sphi 0, %s43
      %s60 = sphi 0, %s44
      %s66 = sphi 0, %s68
      %s69 = sphi 0, %s66
      %s70 = sphi 0, %s69
      %s86 = sphi 0, %s70
      %s92 = sphi 0, %s94
      %s95 = sphi 0, %s92
      %s96 = sphi 0, %s95
      %s112 = sphi 0, %s96
      %s118 = sphi 0, %s120
      %s121 = sphi 0, %s118
      %s122 = sphi 0, %s121
      %s138 = sphi 0, %s122
      %s142 = sphi 0, %s142
      %s144 = sphi 0, %s142
      %s145 = sphi 0, %s144
      %s159 = sphi 0, %s145
      %s165 = sphi 0, %s167
      %s168 = sphi 0, %s165
      %s169 = sphi 0, %s168
      %s185 = sphi 0, %s169
    $region4: #{tpu_custom_call.1} parent=1 // loop_header_branch
      %21 = sbr.rel (%p19) target = $region8
    $region5: #{tpu_custom_call.1} parent=1 // loop_body
      %s23 = ssub.s32 %s18, 1
      %s24 = ssub.s32 %s18, 2
      %s31 = sadd.s32 1, %s26
      %p32 = scmp.ge.s32.totalorder %s31, 1
      %s33 = scalar_select %p32, 0, %s31
      %s34 = sadd.s32 1, %s25
      %s35 = scalar_select %p32, %s34, %s25
      %p36 = scmp.ge.s32.totalorder %s35, 2
      %s37 = scalar_select %p36, 0, %s35
      %s38 = ssub.s32 %s25, %s37
      %p39 = scmp.eq.s32.totalorder %s38, 0
      %s41 = sadd.s32 %s40, 1
      %s42 = scalar_select %p39, %s40, %s41
      %p45 = pneg %p39
      %p46 = scmp.eq.s32.totalorder %s18, 1
      %p47 = por %p45, %p46
      %p48 = scmp.ne.s32.totalorder %s40, %s43
      %p49 = scmp.eq.s32.totalorder %s18, 0
      %p50 = por %p48, %p49
      %p51 = scmp.ne.s32.totalorder %s40, %s43
      %p52 = scmp.eq.s32.totalorder %s23, 1
      %p53 = por %p51, %p52
      %p54 = scmp.ne.s32.totalorder %s43, %s44
      %p55 = scmp.eq.s32.totalorder %s23, 0
      %p56 = por %p54, %p55
      %p57 = scmp.ne.s32.totalorder %s43, %s44
      %p58 = scmp.eq.s32.totalorder %s24, 1
      %p59 = por %p57, %p58
      %p61 = scmp.ne.s32.totalorder %s44, %s60
      %p62 = scmp.eq.s32.totalorder %s24, 0
      %p63 = por %p61, %p62
      %s64 = ssub.s32 %s26, %s33
      %p65 = scmp.eq.s32.totalorder %s64, 0
      %s67 = sadd.s32 %s66, 1
      %s68 = scalar_select %p65, %s66, %s67
      %p71 = pneg %p65
      %p72 = scmp.eq.s32.totalorder %s18, 1
      %p73 = por %p71, %p72
      %p74 = scmp.ne.s32.totalorder %s66, %s69
      %p75 = scmp.eq.s32.totalorder %s18, 0
      %p76 = por %p74, %p75
      %p77 = scmp.ne.s32.totalorder %s66, %s69
      %p78 = scmp.eq.s32.totalorder %s23, 1
      %p79 = por %p77, %p78
      %p80 = scmp.ne.s32.totalorder %s69, %s70
      %p81 = scmp.eq.s32.totalorder %s23, 0
      %p82 = por %p80, %p81
      %p83 = scmp.ne.s32.totalorder %s69, %s70
      %p84 = scmp.eq.s32.totalorder %s24, 1
      %p85 = por %p83, %p84
      %p87 = scmp.ne.s32.totalorder %s70, %s86
      %p88 = scmp.eq.s32.totalorder %s24, 0
      %p89 = por %p87, %p88
      %s90 = ssub.s32 %s26, %s33
      %p91 = scmp.eq.s32.totalorder %s90, 0
      %s93 = sadd.s32 %s92, 1
      %s94 = scalar_select %p91, %s92, %s93
      %p97 = pneg %p91
      %p98 = scmp.eq.s32.totalorder %s18, 1
      %p99 = por %p97, %p98
      %p100 = scmp.ne.s32.totalorder %s92, %s95
      %p101 = scmp.eq.s32.totalorder %s18, 0
      %p102 = por %p100, %p101
      %p103 = scmp.ne.s32.totalorder %s92, %s95
      %p104 = scmp.eq.s32.totalorder %s23, 1
      %p105 = por %p103, %p104
      %p106 = scmp.ne.s32.totalorder %s95, %s96
      %p107 = scmp.eq.s32.totalorder %s23, 0
      %p108 = por %p106, %p107
      %p109 = scmp.ne.s32.totalorder %s95, %s96
      %p110 = scmp.eq.s32.totalorder %s24, 1
      %p111 = por %p109, %p110
      %p113 = scmp.ne.s32.totalorder %s96, %s112
      %p114 = scmp.eq.s32.totalorder %s24, 0
      %p115 = por %p113, %p114
      %s116 = ssub.s32 %s26, %s33
      %p117 = scmp.eq.s32.totalorder %s116, 0
      %s119 = sadd.s32 %s118, 1
      %s120 = scalar_select %p117, %s118, %s119
      %p123 = pneg %p117
      %p124 = scmp.eq.s32.totalorder %s18, 1
      %p125 = por %p123, %p124
      %p126 = scmp.ne.s32.totalorder %s118, %s121
      %p127 = scmp.eq.s32.totalorder %s18, 0
      %p128 = por %p126, %p127
      %p129 = scmp.ne.s32.totalorder %s118, %s121
      %p130 = scmp.eq.s32.totalorder %s23, 1
      %p131 = por %p129, %p130
      %p132 = scmp.ne.s32.totalorder %s121, %s122
      %p133 = scmp.eq.s32.totalorder %s23, 0
      %p134 = por %p132, %p133
      %p135 = scmp.ne.s32.totalorder %s121, %s122
      %p136 = scmp.eq.s32.totalorder %s24, 1
      %p137 = por %p135, %p136
      %p139 = scmp.ne.s32.totalorder %s122, %s138
      %p140 = scmp.eq.s32.totalorder %s24, 0
      %p141 = por %p139, %p140
      %s143 = sadd.s32 %s142, 1
      %p146 = scmp.eq.s32.totalorder %s18, 1
      %p147 = scmp.ne.s32.totalorder %s142, %s144
      %p148 = scmp.eq.s32.totalorder %s18, 0
      %p149 = por %p147, %p148
      %p150 = scmp.ne.s32.totalorder %s142, %s144
      %p151 = scmp.eq.s32.totalorder %s23, 1
      %p152 = por %p150, %p151
      %p153 = scmp.ne.s32.totalorder %s144, %s145
      %p154 = scmp.eq.s32.totalorder %s23, 0
      %p155 = por %p153, %p154
      %p156 = scmp.ne.s32.totalorder %s144, %s145
      %p157 = scmp.eq.s32.totalorder %s24, 1
      %p158 = por %p156, %p157
      %p160 = scmp.ne.s32.totalorder %s145, %s159
      %p161 = scmp.eq.s32.totalorder %s24, 0
      %p162 = por %p160, %p161
      %s163 = ssub.s32 %s25, %s37
      %p164 = scmp.eq.s32.totalorder %s163, 0
      %s166 = sadd.s32 %s165, 1
      %s167 = scalar_select %p164, %s165, %s166
      %p170 = pneg %p164
      %p171 = scmp.eq.s32.totalorder %s18, 1
      %p172 = por %p170, %p171
      %p173 = scmp.ne.s32.totalorder %s165, %s168
      %p174 = scmp.eq.s32.totalorder %s18, 0
      %p175 = por %p173, %p174
      %p176 = scmp.ne.s32.totalorder %s165, %s168
      %p177 = scmp.eq.s32.totalorder %s23, 1
      %p178 = por %p176, %p177
      %p179 = scmp.ne.s32.totalorder %s168, %s169
      %p180 = scmp.eq.s32.totalorder %s23, 0
      %p181 = por %p179, %p180
      %p182 = scmp.ne.s32.totalorder %s168, %s169
      %p183 = scmp.eq.s32.totalorder %s24, 1
      %p184 = por %p182, %p183
      %p186 = scmp.ne.s32.totalorder %s169, %s185
      %p187 = scmp.eq.s32.totalorder %s24, 0
      %p188 = por %p186, %p187
      %p189 = scmp.le.s32.totalorder 1, %s18
      %p190 = scmp.lt.s32.totalorder %s18, 3
      %p191 = pnand %p189, %p190
      %p192 = pneg %p191
      // Predicated region
      $region9: #{tpu_custom_call.1} parent=5 // pred_check
        _
      $region10: #{tpu_custom_call.1} parent=5 // pred_check_branch
        %194 = sbr.rel (%p191) target = $region12
      $region11: #{tpu_custom_call.1} parent=5 // pred_region
        %s195 = ssub.s32 %s18, 1
        // Predicated region
        $region13: #{tpu_custom_call.1} parent=11 // pred_check
          %p196 = pneg %p82
        $region14: #{tpu_custom_call.1} parent=11 // pred_check_branch
          %198 = sbr.rel (%p196) target = $region16
        $region15: #{tpu_custom_call.1} parent=11 // pred_region
          %s199 = smul.u32 3, %s28
          %s201 = ssub.s32 3072, 3072
          %202 = vsyncadd [#allocation7], %s201
          %s203 = smul.addr %s199, 64
          %s204 = scalar_lea.hbm %s1, %s203
          %s205 = sshll.u32 [#allocation6], 4
          %s206 = int_to_ptr.vmem [resolvable:$true] %s205
          %211 = dma.hbm_to_vmem [thread:$0]  %s204, 3072, %s206, [#allocation7], 192, 192, 12
        $region16: #{tpu_custom_call.1} parent=11 // pred_fallthru
          _
        // Predicated region
        $region17: #{tpu_custom_call.1} parent=11 // pred_check
          %p212 = pneg %p108
        $region18: #{tpu_custom_call.1} parent=11 // pred_check_branch
          %214 = sbr.rel (%p212) target = $region20
        $region19: #{tpu_custom_call.1} parent=11 // pred_region
          %s215 = smul.u32 3, %s28
          %p216 = scmp.lt.s32.totalorder %s215, 2
          %s217 = scalar_select %p216, %s215, 2
          %s218 = scalar_lea.vmem %s2, %s217
          %s219 = smul.u32 3, %s28
        $region20: #{tpu_custom_call.1} parent=11 // pred_fallthru
          _
        // Predicated region
        $region21: #{tpu_custom_call.1} parent=11 // pred_check
          %p220 = pneg %p134
        $region22: #{tpu_custom_call.1} parent=11 // pred_check_branch
          %222 = sbr.rel (%p220) target = $region24
        $region23: #{tpu_custom_call.1} parent=11 // pred_region
          %s223 = smul.u32 48, %s28
          %s225 = ssub.s32 3072, 3072
          %226 = vsyncadd [#allocation7], %s225
          %s227 = smul.addr %s223, 64
          %s228 = scalar_lea.hbm %s3, %s227
          %s229 = sshll.u32 [#allocation8], 4
          %s230 = int_to_ptr.vmem [resolvable:$true] %s229
          %235 = dma.hbm_to_vmem [thread:$0]  %s228, 3072, %s230, [#allocation7], 64, 64, 4
        $region24: #{tpu_custom_call.1} parent=11 // pred_fallthru
          _
        // Predicated region
        $region25: #{tpu_custom_call.1} parent=11 // pred_check
          %p236 = pneg %p155
        $region26: #{tpu_custom_call.1} parent=11 // pred_check_branch
          %238 = sbr.rel (%p236) target = $region28
        $region27: #{tpu_custom_call.1} parent=11 // pred_region
          _
        $region28: #{tpu_custom_call.1} parent=11 // pred_fallthru
          _
      $region12: #{tpu_custom_call.1} parent=5 // pred_fallthru
        _
      %p239 = scmp.lt.s32.totalorder %s18, 2
      // Predicated region
      $region29: #{tpu_custom_call.1} parent=5 // pred_check
        %p240 = pneg %p239
      $region30: #{tpu_custom_call.1} parent=5 // pred_check_branch
        %242 = sbr.rel (%p240) target = $region32
      $region31: #{tpu_custom_call.1} parent=5 // pred_region
        // Predicated region
        $region33: #{tpu_custom_call.1} parent=31 // pred_check
          %p243 = pneg %p50
        $region34: #{tpu_custom_call.1} parent=31 // pred_check_branch
          %245 = sbr.rel (%p243) target = $region36
        $region35: #{tpu_custom_call.1} parent=31 // pred_region
          %s246 = sand.u32 %s40, 1
          %s247 = scalar_lea.sflag [#allocation4], %s246
          %s248 = sand.u32 %s40, 1
          %s249 = smul.addr %s248, 64
          %s250 = scalar_lea.vmem [#allocation3], %s249
          %s251 = smul.u32 8, %s25
          %s253 = ssub.s32 1024, 1024
          %254 = vsyncadd %s247, %s253
          %s255 = smul.addr %s251, 128
          %s256 = scalar_lea.hbm %s0, %s255
          %s257 = sshll.u32 %s250, 4
          %s258 = int_to_ptr.vmem [resolvable:$true] %s257
          %263 = dma.hbm_to_vmem [thread:$0]  %s256, 1024, %s258, %s247, 128, 128, 8
        $region36: #{tpu_custom_call.1} parent=31 // pred_fallthru
          _
      $region32: #{tpu_custom_call.1} parent=5 // pred_fallthru
        _
      %p264 = scmp.le.s32.totalorder 1, %s18
      %p265 = scmp.lt.s32.totalorder %s18, 3
      %p266 = pnand %p264, %p265
      %p267 = pneg %p266
      // Predicated region
      $region37: #{tpu_custom_call.1} parent=5 // pred_check
        _
      $region38: #{tpu_custom_call.1} parent=5 // pred_check_branch
        %269 = sbr.rel (%p266) target = $region40
      $region39: #{tpu_custom_call.1} parent=5 // pred_region
        %s270 = ssub.s32 %s18, 1
        %s271 = sand.u32 %s43, 1
        %s272 = scalar_lea.sflag [#allocation4], %s271
        %s273 = sand.u32 %s43, 1
        %s274 = smul.addr %s273, 64
        %s275 = scalar_lea.vmem [#allocation3], %s274
        // Predicated region
        $region41: #{tpu_custom_call.1} parent=39 // pred_check
          %p276 = pneg %p56
        $region42: #{tpu_custom_call.1} parent=39 // pred_check_branch
          %278 = sbr.rel (%p276) target = $region44
        $region43: #{tpu_custom_call.1} parent=39 // pred_region
          %279 = dma.done %s272, 1024
        $region44: #{tpu_custom_call.1} parent=39 // pred_fallthru
          _
        // Predicated region
        $region45: #{tpu_custom_call.1} parent=39 // pred_check
          %p280 = pneg %p82
        $region46: #{tpu_custom_call.1} parent=39 // pred_check_branch
          %282 = sbr.rel (%p280) target = $region48
        $region47: #{tpu_custom_call.1} parent=39 // pred_region
          %283 = dma.done [#allocation7], 3072
        $region48: #{tpu_custom_call.1} parent=39 // pred_fallthru
          _
        // Predicated region
        $region49: #{tpu_custom_call.1} parent=39 // pred_check
          %p284 = pneg %p134
        $region50: #{tpu_custom_call.1} parent=39 // pred_check_branch
          %286 = sbr.rel (%p284) target = $region52
        $region51: #{tpu_custom_call.1} parent=39 // pred_region
          %287 = dma.done [#allocation7], 3072
        $region52: #{tpu_custom_call.1} parent=39 // pred_fallthru
          _
        %s288 = sand.u32 %s43, 1
        %s289 = scalar_lea.sflag [#allocation4], %s288
        %s290 = sand.u32 %s43, 1
        %s291 = smul.addr %s290, 64
        %s292 = scalar_lea.vmem [#allocation3], %s291
        %p293 = pneg %p56
        %p294 = pneg %p53
        %p295 = pneg %p82
        %p296 = pneg %p79
        %s297 = smul.u32 3, %s28
        %p298 = scmp.lt.s32.totalorder %s297, 2
        %s299 = scalar_select %p298, %s297, 2
        %s300 = scalar_lea.vmem %s2, %s299
        %p301 = pneg %p108
        %p302 = pneg %p105
        %p303 = pneg %p134
        %p304 = pneg %p131
        %p305 = pneg %p155
        %p306 = pneg %p152
        %p307 = pneg %p181
        %p308 = pneg %p178
        %s309 = sand.u32 %s168, 1
        %s310 = scalar_lea.sflag [#allocation5], %s309
        %s311 = sand.u32 %s168, 1
        %s312 = smul.addr %s311, 64
        %s313 = scalar_lea.vmem [#allocation9], %s312
        %s314 = smul.u32 8, %s27
        %s315 = smul.u32 3, %s28
        %s316 = smul.u32 3, %s28
        %p317 = scmp.lt.s32.totalorder %s316, 2
        %s318 = scalar_select %p317, %s316, 2
        %s319 = scalar_lea.vmem %s2, %s318
        %s320 = smul.u32 3, %s28
        %s321 = smul.u32 48, %s28
        %s322 = smul.u32 8, %s27
        %p328 = scmp.eq.s32.totalorder %s28, 0
        // Predicated region
        $region53: #{tpu_custom_call.1} parent=39 // pred_check
          %p329 = pneg %p328
        $region54: #{tpu_custom_call.1} parent=39 // pred_check_branch
          %331 = sbr.rel (%p329) target = $region56
        $region55: #{tpu_custom_call.1} parent=39 // pred_region
          %332 = vst [vmem:[#allocation2] sm:$0xff] 0.0
          %333 = vst [vmem:[#allocation2 + $0x8] sm:$0xff] 0.0
          %334 = vst [vmem:[#allocation2 + $0x10] sm:$0xff] 0.0
          %335 = vst [vmem:[#allocation2 + $0x18] sm:$0xff] 0.0
          %336 = vst [vmem:[#allocation2 + $0x20] sm:$0xff] 0.0
          %337 = vst [vmem:[#allocation2 + $0x28] sm:$0xff] 0.0
          %338 = vst [vmem:[#allocation2 + $0x30] sm:$0xff] 0.0
          %339 = vst [vmem:[#allocation2 + $0x38] sm:$0xff] 0.0
        $region56: #{tpu_custom_call.1} parent=39 // pred_fallthru
          _
        %v340 = vld [vmem:[%s275] sm:$0xff]
        %v341 = vld [vmem:[%s275 + $0x8] sm:$0xff]
        %v342 = vld [vmem:[%s275 + $0x10] sm:$0xff]
        %v343 = vld [vmem:[%s275 + $0x18] sm:$0xff]
        %v344 = vld [vmem:[%s275 + $0x20] sm:$0xff]
        %v345 = vld [vmem:[%s275 + $0x28] sm:$0xff]
        %v346 = vld [vmem:[%s275 + $0x30] sm:$0xff]
        %v347 = vld [vmem:[%s275 + $0x38] sm:$0xff]
        %v348 = vpack.c.bf16 %v341, %v340
        %v349 = vpack.c.bf16 %v343, %v342
        %v350 = vpack.c.bf16 %v345, %v344
        %v351 = vpack.c.bf16 %v347, %v346
        %v352 = vld [vmem:[#allocation6] sm:$0xff]
        %v353 = vld [vmem:[#allocation6 + $0x8] sm:$0xf]
        %v354 = vld [vmem:[#allocation6 + $0xc] sm:$0xff]
        %v355 = vld [vmem:[#allocation6 + $0x14] sm:$0xf]
        %v356 = vld [vmem:[#allocation6 + $0x18] sm:$0xff]
        %v357 = vld [vmem:[#allocation6 + $0x20] sm:$0xf]
        %v358 = vld [vmem:[#allocation6 + $0x24] sm:$0xff]
        %v359 = vld [vmem:[#allocation6 + $0x2c] sm:$0xf]
        %v360 = vld [vmem:[#allocation6 + $0x30] sm:$0xff]
        %v361 = vld [vmem:[#allocation6 + $0x38] sm:$0xf]
        %v362 = vld [vmem:[#allocation6 + $0x3c] sm:$0xff]
        %v363 = vld [vmem:[#allocation6 + $0x44] sm:$0xf]
        %v364 = vld [vmem:[#allocation6 + $0x48] sm:$0xff]
        %v365 = vld [vmem:[#allocation6 + $0x50] sm:$0xf]
        %v366 = vld [vmem:[#allocation6 + $0x54] sm:$0xff]
        %v367 = vld [vmem:[#allocation6 + $0x5c] sm:$0xf]
        %v368 = vld [vmem:[#allocation6 + $0x60] sm:$0xff]
        %v369 = vld [vmem:[#allocation6 + $0x68] sm:$0xf]
        %v370 = vld [vmem:[#allocation6 + $0x6c] sm:$0xff]
        %v371 = vld [vmem:[#allocation6 + $0x74] sm:$0xf]
        %v372 = vld [vmem:[#allocation6 + $0x78] sm:$0xff]
        %v373 = vld [vmem:[#allocation6 + $0x80] sm:$0xf]
        %v374 = vld [vmem:[#allocation6 + $0x84] sm:$0xff]
        %v375 = vld [vmem:[#allocation6 + $0x8c] sm:$0xf]
        %v376 = vld [vmem:[#allocation6 + $0x90] sm:$0xff]
        %v377 = vld [vmem:[#allocation6 + $0x98] sm:$0xf]
        %v378 = vld [vmem:[#allocation6 + $0x9c] sm:$0xff]
        %v379 = vld [vmem:[#allocation6 + $0xa4] sm:$0xf]
        %v380 = vld [vmem:[#allocation6 + $0xa8] sm:$0xff]
        %v381 = vld [vmem:[#allocation6 + $0xb0] sm:$0xf]
        %v382 = vld [vmem:[#allocation6 + $0xb4] sm:$0xff]
        %v383 = vld [vmem:[#allocation6 + $0xbc] sm:$0xf]
        %v384 = vld [vmem:[%s319] sm:$0x7]
        %v386 = vlaneseq
        %v387 = vshrl.u32 %v386, 7
        %v388 = vsub.s32 0, %v387
        %v389 = vrot.slane %v384, %v388
        %v390 = vlaneseq
        %v391 = vshrl.u32 %v390, 7
        %v392 = vsub.s32 1, %v391
        %v393 = vrot.slane %v384, %v392
        %v394 = vlaneseq
        %v395 = vshrl.u32 %v394, 7
        %v396 = vsub.s32 2, %v395
        %v397 = vrot.slane %v384, %v396
        %v433 = vunpack.c.l.b16 %v352
        %v434 = vunpack.c.h.b16 %v352
        %v435 = vunpack.c.l.b16 %v353
        %v436 = vunpack.c.l.b16 %v354
        %v437 = vunpack.c.h.b16 %v354
        %v438 = vunpack.c.l.b16 %v355
        %v439 = vunpack.c.l.b16 %v356
        %v440 = vunpack.c.h.b16 %v356
        %v441 = vunpack.c.l.b16 %v357
        %v442 = vunpack.c.l.b16 %v358
        %v443 = vunpack.c.h.b16 %v358
        %v444 = vunpack.c.l.b16 %v359
        %v445 = vunpack.c.l.b16 %v360
        %v446 = vunpack.c.h.b16 %v360
        %v447 = vunpack.c.l.b16 %v361
        %v448 = vunpack.c.l.b16 %v362
        %v449 = vunpack.c.h.b16 %v362
        %v450 = vunpack.c.l.b16 %v363
        %v451 = vunpack.c.l.b16 %v364
        %v452 = vunpack.c.h.b16 %v364
        %v453 = vunpack.c.l.b16 %v365
        %v454 = vunpack.c.l.b16 %v366
        %v455 = vunpack.c.h.b16 %v366
        %v456 = vunpack.c.l.b16 %v367
        %v457 = vunpack.c.l.b16 %v368
        %v458 = vunpack.c.h.b16 %v368
        %v459 = vunpack.c.l.b16 %v369
        %v460 = vunpack.c.l.b16 %v370
        %v461 = vunpack.c.h.b16 %v370
        %v462 = vunpack.c.l.b16 %v371
        %v463 = vunpack.c.l.b16 %v372
        %v464 = vunpack.c.h.b16 %v372
        %v465 = vunpack.c.l.b16 %v373
        %v466 = vunpack.c.l.b16 %v374
        %v467 = vunpack.c.h.b16 %v374
        %v468 = vunpack.c.l.b16 %v375
        %v469 = vunpack.c.l.b16 %v376
        %v470 = vunpack.c.h.b16 %v376
        %v471 = vunpack.c.l.b16 %v377
        %v472 = vunpack.c.l.b16 %v378
        %v473 = vunpack.c.h.b16 %v378
        %v474 = vunpack.c.l.b16 %v379
        %v475 = vunpack.c.l.b16 %v380
        %v476 = vunpack.c.h.b16 %v380
        %v477 = vunpack.c.l.b16 %v381
        %v478 = vunpack.c.l.b16 %v382
        %v479 = vunpack.c.h.b16 %v382
        %v480 = vunpack.c.l.b16 %v383
        %v481 = vpack.c.b16 %v436, %v433
        %v482 = vpack.c.b16 %v437, %v434
        %v483 = vpack.c.b16 %v438, %v435
        %v484 = vpack.c.b16 %v442, %v439
        %v485 = vpack.c.b16 %v443, %v440
        %v486 = vpack.c.b16 %v444, %v441
        %v487 = vpack.c.b16 %v448, %v445
        %v488 = vpack.c.b16 %v449, %v446
        %v489 = vpack.c.b16 %v450, %v447
        %v490 = vpack.c.b16 %v454, %v451
        %v491 = vpack.c.b16 %v455, %v452
        %v492 = vpack.c.b16 %v456, %v453
        %v493 = vpack.c.b16 %v460, %v457
        %v494 = vpack.c.b16 %v461, %v458
        %v495 = vpack.c.b16 %v462, %v459
        %v496 = vpack.c.b16 %v466, %v463
        %v497 = vpack.c.b16 %v467, %v464
        %v498 = vpack.c.b16 %v468, %v465
        %v499 = vpack.c.b16 %v472, %v469
        %v500 = vpack.c.b16 %v473, %v470
        %v501 = vpack.c.b16 %v474, %v471
        %v502 = vpack.c.b16 %v478, %v475
        %v503 = vpack.c.b16 %v479, %v476
        %v504 = vpack.c.b16 %v480, %v477
        %529 = vmatprep.subr.bf16.mxu0 %v482
        %530 = vmatpush1.bf16.msra.mxu0 %v481
        %531 = vmatprep.subr.bf16.mxu0 %v485
        %532 = vmatpush1.bf16.msra.mxu0 %v484
        %533 = vmatprep.subr.bf16.mxu0 %v488
        %534 = vmatpush1.bf16.msra.mxu0 %v487
        %535 = vmatprep.subr.bf16.mxu0 %v491
        %536 = vmatpush1.bf16.msra.mxu0 %v490
        %537 = vmatprep.subr.bf16.mxu0 %v494
        %538 = vmatpush1.bf16.msra.mxu0 %v493
        %539 = vmatprep.subr.bf16.mxu0 %v497
        %540 = vmatpush1.bf16.msra.mxu0 %v496
        %541 = vmatprep.subr.bf16.mxu0 %v500
        %542 = vmatpush1.bf16.msra.mxu0 %v499
        %543 = vmatprep.subr.bf16.mxu0 %v503
        %544 = vmatpush1.bf16.msra.mxu0 %v502
        %545 = vmatprep.subr.bf16.mxu0 0
        %546 = vmatpush1.bf16.msra.mxu0 0
        %547 = vmatprep.subr.bf16.mxu0 0
        %548 = vmatpush1.bf16.msra.mxu0 0
        %549 = vmatprep.subr.bf16.mxu0 0
        %550 = vmatpush1.bf16.msra.mxu0 0
        %551 = vmatprep.subr.bf16.mxu0 0
        %552 = vmatpush1.bf16.msra.mxu0 0
        %553 = vmatprep.subr.bf16.mxu0 0
        %554 = vmatpush1.bf16.msra.mxu0 0
        %555 = vmatprep.subr.bf16.mxu0 0
        %556 = vmatpush1.bf16.msra.mxu0 0
        %557 = vmatprep.subr.bf16.mxu0 0
        %558 = vmatpush1.bf16.msra.mxu0 0
        %559 = vmatprep.subr.bf16.mxu0 0
        %560 = vmatpush1.bf16.msra.mxu0 0
        %561 = vmatprep.mubr.bf16.mxu0 0
        %562 = vmatmul.mubr.bf16.gmra.mrb[0].mxu0 %v348
        %v563 = vpop.f32.mrb[0].mxu0
        %v564 = vadd.f32 %v389, %v563
        %v565 = vpop.f32.mrb[0].mxu0
        %v566 = vadd.f32 %v393, %v565
        %v567 = vpop.f32.mrb[0].mxu0
        %v568 = vadd.f32 %v389, %v567
        %v569 = vpop.f32.mrb[0].mxu0
        %v570 = vadd.f32 %v393, %v569
        %571 = vmatprep.mubr.bf16.mxu0 0
        %572 = vmatmul.mubr.bf16.gmra.mrb[0].mxu0 %v349
        %v573 = vpop.f32.mrb[0].mxu0
        %v574 = vadd.f32 %v389, %v573
        %v575 = vpop.f32.mrb[0].mxu0
        %v576 = vadd.f32 %v393, %v575
        %v577 = vpop.f32.mrb[0].mxu0
        %v578 = vadd.f32 %v389, %v577
        %v579 = vpop.f32.mrb[0].mxu0
        %v580 = vadd.f32 %v393, %v579
        %581 = vmatprep.mubr.bf16.mxu0 0
        %582 = vmatmul.mubr.bf16.gmra.mrb[0].mxu0 %v350
        %v583 = vpop.f32.mrb[0].mxu0
        %v584 = vadd.f32 %v389, %v583
        %v585 = vpop.f32.mrb[0].mxu0
        %v586 = vadd.f32 %v393, %v585
        %v587 = vpop.f32.mrb[0].mxu0
        %v588 = vadd.f32 %v389, %v587
        %v589 = vpop.f32.mrb[0].mxu0
        %v590 = vadd.f32 %v393, %v589
        %591 = vmatprep.mubr.bf16.mxu0 0
        %592 = vmatmul.mubr.bf16.gmra.mrb[0].mxu0 %v351
        %v593 = vpop.f32.mrb[0].mxu0
        %v594 = vadd.f32 %v389, %v593
        %v595 = vpop.f32.mrb[0].mxu0
        %v596 = vadd.f32 %v393, %v595
        %v597 = vpop.f32.mrb[0].mxu0
        %v598 = vadd.f32 %v389, %v597
        %v599 = vpop.f32.mrb[0].mxu0
        %v600 = vadd.f32 %v393, %v599
        %601 = vdwg.mxu0
        %602 = vmatprep.subr.bf16.mxu0 0
        %603 = vmatpush1.bf16.msra.mxu0 %v483
        %604 = vmatprep.subr.bf16.mxu0 0
        %605 = vmatpush1.bf16.msra.mxu0 %v486
        %606 = vmatprep.subr.bf16.mxu0 0
        %607 = vmatpush1.bf16.msra.mxu0 %v489
        %608 = vmatprep.subr.bf16.mxu0 0
        %609 = vmatpush1.bf16.msra.mxu0 %v492
        %610 = vmatprep.subr.bf16.mxu0 0
        %611 = vmatpush1.bf16.msra.mxu0 %v495
        %612 = vmatprep.subr.bf16.mxu0 0
        %613 = vmatpush1.bf16.msra.mxu0 %v498
        %614 = vmatprep.subr.bf16.mxu0 0
        %615 = vmatpush1.bf16.msra.mxu0 %v501
        %616 = vmatprep.subr.bf16.mxu0 0
        %617 = vmatpush1.bf16.msra.mxu0 %v504
        %618 = vmatprep.subr.bf16.mxu0 0
        %619 = vmatpush1.bf16.msra.mxu0 0
        %620 = vmatprep.subr.bf16.mxu0 0
        %621 = vmatpush1.bf16.msra.mxu0 0
        %622 = vmatprep.subr.bf16.mxu0 0
        %623 = vmatpush1.bf16.msra.mxu0 0
        %624 = vmatprep.subr.bf16.mxu0 0
        %625 = vmatpush1.bf16.msra.mxu0 0
        %626 = vmatprep.subr.bf16.mxu0 0
        %627 = vmatpush1.bf16.msra.mxu0 0
        %628 = vmatprep.subr.bf16.mxu0 0
        %629 = vmatpush1.bf16.msra.mxu0 0
        %630 = vmatprep.subr.bf16.mxu0 0
        %631 = vmatpush1.bf16.msra.mxu0 0
        %632 = vmatprep.subr.bf16.mxu0 0
        %633 = vmatpush1.bf16.msra.mxu0 0
        %634 = vmatprep.mubr.bf16.mxu0 0
        %635 = vmatmul.mubr.bf16.gmra.mrb[0].mxu0 %v348
        %v636 = vpop.f32.mrb[0].mxu0
        %v637 = vadd.f32 %v397, %v636
        %v638 = vpop.f32.mrb[0].mxu0
        %v639 = vpop.f32.mrb[0].mxu0
        %v640 = vadd.f32 %v397, %v639
        %v641 = vpop.f32.mrb[0].mxu0
        %642 = vmatprep.mubr.bf16.mxu0 0
        %643 = vmatmul.mubr.bf16.gmra.mrb[0].mxu0 %v349
        %v644 = vpop.f32.mrb[0].mxu0
        %v645 = vadd.f32 %v397, %v644
        %v646 = vpop.f32.mrb[0].mxu0
        %v647 = vpop.f32.mrb[0].mxu0
        %v648 = vadd.f32 %v397, %v647
        %v649 = vpop.f32.mrb[0].mxu0
        %650 = vmatprep.mubr.bf16.mxu0 0
        %651 = vmatmul.mubr.bf16.gmra.mrb[0].mxu0 %v350
        %v652 = vpop.f32.mrb[0].mxu0
        %v653 = vadd.f32 %v397, %v652
        %v654 = vpop.f32.mrb[0].mxu0
        %v655 = vpop.f32.mrb[0].mxu0
        %v656 = vadd.f32 %v397, %v655
        %v657 = vpop.f32.mrb[0].mxu0
        %658 = vmatprep.mubr.bf16.mxu0 0
        %659 = vmatmul.mubr.bf16.gmra.mrb[0].mxu0 %v351
        %v660 = vpop.f32.mrb[0].mxu0
        %v661 = vadd.f32 %v397, %v660
        %v662 = vpop.f32.mrb[0].mxu0
        %v663 = vpop.f32.mrb[0].mxu0
        %v664 = vadd.f32 %v397, %v663
        %v665 = vpop.f32.mrb[0].mxu0
        %666 = vdwg.mxu0
        %v667 = vpack.c.bf16 %v568, %v564
        %v668 = vpack.c.bf16 %v570, %v566
        %v669 = vpack.c.bf16 %v640, %v637
        %v670 = vpack.c.bf16 %v578, %v574
        %v671 = vpack.c.bf16 %v580, %v576
        %v672 = vpack.c.bf16 %v648, %v645
        %v673 = vpack.c.bf16 %v588, %v584
        %v674 = vpack.c.bf16 %v590, %v586
        %v675 = vpack.c.bf16 %v656, %v653
        %v676 = vpack.c.bf16 %v598, %v594
        %v677 = vpack.c.bf16 %v600, %v596
        %v678 = vpack.c.bf16 %v664, %v661
        %v679 = vmul.bf16 %v667, %v667
        %v680 = vmul.bf16 %v668, %v668
        %v681 = vmul.bf16 %v669, %v669
        %v682 = vmul.bf16 %v670, %v670
        %v683 = vmul.bf16 %v671, %v671
        %v684 = vmul.bf16 %v672, %v672
        %v685 = vmul.bf16 %v673, %v673
        %v686 = vmul.bf16 %v674, %v674
        %v687 = vmul.bf16 %v675, %v675
        %v688 = vmul.bf16 %v676, %v676
        %v689 = vmul.bf16 %v677, %v677
        %v690 = vmul.bf16 %v678, %v678
        %v691 = vmul.bf16 %v667, %v679
        %v692 = vmul.bf16 %v668, %v680
        %v693 = vmul.bf16 %v669, %v681
        %v694 = vmul.bf16 %v670, %v682
        %v695 = vmul.bf16 %v671, %v683
        %v696 = vmul.bf16 %v672, %v684
        %v697 = vmul.bf16 %v673, %v685
        %v698 = vmul.bf16 %v674, %v686
        %v699 = vmul.bf16 %v675, %v687
        %v700 = vmul.bf16 %v676, %v688
        %v701 = vmul.bf16 %v677, %v689
        %v702 = vmul.bf16 %v678, %v690
        %v703 = vmul.bf16 %v691, 1027030327
        %v704 = vmul.bf16 %v692, 1027030327
        %v705 = vmul.bf16 %v693, 1027030327
        %v706 = vmul.bf16 %v694, 1027030327
        %v707 = vmul.bf16 %v695, 1027030327
        %v708 = vmul.bf16 %v696, 1027030327
        %v709 = vmul.bf16 %v697, 1027030327
        %v710 = vmul.bf16 %v698, 1027030327
        %v711 = vmul.bf16 %v699, 1027030327
        %v712 = vmul.bf16 %v700, 1027030327
        %v713 = vmul.bf16 %v701, 1027030327
        %v714 = vmul.bf16 %v702, 1027030327
        %v715 = vadd.bf16 %v667, %v703
        %v716 = vadd.bf16 %v668, %v704
        %v717 = vadd.bf16 %v669, %v705
        %v718 = vadd.bf16 %v670, %v706
        %v719 = vadd.bf16 %v671, %v707
        %v720 = vadd.bf16 %v672, %v708
        %v721 = vadd.bf16 %v673, %v709
        %v722 = vadd.bf16 %v674, %v710
        %v723 = vadd.bf16 %v675, %v711
        %v724 = vadd.bf16 %v676, %v712
        %v725 = vadd.bf16 %v677, %v713
        %v726 = vadd.bf16 %v678, %v714
        %v727 = vmul.bf16 %v715, 1061961548
        %v728 = vmul.bf16 %v716, 1061961548
        %v729 = vmul.bf16 %v717, 1061961548
        %v730 = vmul.bf16 %v718, 1061961548
        %v731 = vmul.bf16 %v719, 1061961548
        %v732 = vmul.bf16 %v720, 1061961548
        %v733 = vmul.bf16 %v721, 1061961548
        %v734 = vmul.bf16 %v722, 1061961548
        %v735 = vmul.bf16 %v723, 1061961548
        %v736 = vmul.bf16 %v724, 1061961548
        %v737 = vmul.bf16 %v725, 1061961548
        %v738 = vmul.bf16 %v726, 1061961548
        %v739 = vtanh.bf16.pop %v727
        %v740 = vtanh.bf16.pop %v728
        %v741 = vtanh.bf16.pop %v729
        %v742 = vtanh.bf16.pop %v730
        %v743 = vtanh.bf16.pop %v731
        %v744 = vtanh.bf16.pop %v732
        %v745 = vtanh.bf16.pop %v733
        %v746 = vtanh.bf16.pop %v734
        %v747 = vtanh.bf16.pop %v735
        %v748 = vtanh.bf16.pop %v736
        %v749 = vtanh.bf16.pop %v737
        %v750 = vtanh.bf16.pop %v738
        %v751 = vadd.bf16 %v739, 1065369472
        %v752 = vadd.bf16 %v740, 1065369472
        %v753 = vadd.bf16 %v741, 1065369472
        %v754 = vadd.bf16 %v742, 1065369472
        %v755 = vadd.bf16 %v743, 1065369472
        %v756 = vadd.bf16 %v744, 1065369472
        %v757 = vadd.bf16 %v745, 1065369472
        %v758 = vadd.bf16 %v746, 1065369472
        %v759 = vadd.bf16 %v747, 1065369472
        %v760 = vadd.bf16 %v748, 1065369472
        %v761 = vadd.bf16 %v749, 1065369472
        %v762 = vadd.bf16 %v750, 1065369472
        %v763 = vmul.bf16 %v751, 1056980736
        %v764 = vmul.bf16 %v752, 1056980736
        %v765 = vmul.bf16 %v753, 1056980736
        %v766 = vmul.bf16 %v754, 1056980736
        %v767 = vmul.bf16 %v755, 1056980736
        %v768 = vmul.bf16 %v756, 1056980736
        %v769 = vmul.bf16 %v757, 1056980736
        %v770 = vmul.bf16 %v758, 1056980736
        %v771 = vmul.bf16 %v759, 1056980736
        %v772 = vmul.bf16 %v760, 1056980736
        %v773 = vmul.bf16 %v761, 1056980736
        %v774 = vmul.bf16 %v762, 1056980736
        %v775 = vmul.bf16 %v667, %v763
        %v776 = vmul.bf16 %v668, %v764
        %v777 = vmul.bf16 %v669, %v765
        %v778 = vmul.bf16 %v670, %v766
        %v779 = vmul.bf16 %v671, %v767
        %v780 = vmul.bf16 %v672, %v768
        %v781 = vmul.bf16 %v673, %v769
        %v782 = vmul.bf16 %v674, %v770
        %v783 = vmul.bf16 %v675, %v771
        %v784 = vmul.bf16 %v676, %v772
        %v785 = vmul.bf16 %v677, %v773
        %v786 = vmul.bf16 %v678, %v774
        %v787 = vld [vmem:[#allocation2] sm:$0xff]
        %v788 = vld [vmem:[#allocation2 + $0x8] sm:$0xff]
        %v789 = vld [vmem:[#allocation2 + $0x10] sm:$0xff]
        %v790 = vld [vmem:[#allocation2 + $0x18] sm:$0xff]
        %v791 = vld [vmem:[#allocation2 + $0x20] sm:$0xff]
        %v792 = vld [vmem:[#allocation2 + $0x28] sm:$0xff]
        %v793 = vld [vmem:[#allocation2 + $0x30] sm:$0xff]
        %v794 = vld [vmem:[#allocation2 + $0x38] sm:$0xff]
        %v795 = vld [vmem:[#allocation8] sm:$0xf]
        %v796 = vld [vmem:[#allocation8 + $0x4] sm:$0xf]
        %v797 = vld [vmem:[#allocation8 + $0x8] sm:$0xf]
        %v798 = vld [vmem:[#allocation8 + $0xc] sm:$0xf]
        %v799 = vld [vmem:[#allocation8 + $0x10] sm:$0xf]
        %v800 = vld [vmem:[#allocation8 + $0x14] sm:$0xf]
        %v801 = vld [vmem:[#allocation8 + $0x18] sm:$0xf]
        %v802 = vld [vmem:[#allocation8 + $0x1c] sm:$0xf]
        %v803 = vld [vmem:[#allocation8 + $0x20] sm:$0xf]
        %v804 = vld [vmem:[#allocation8 + $0x24] sm:$0xf]
        %v805 = vld [vmem:[#allocation8 + $0x28] sm:$0xf]
        %v806 = vld [vmem:[#allocation8 + $0x2c] sm:$0xf]
        %v807 = vld [vmem:[#allocation8 + $0x30] sm:$0xf]
        %v808 = vld [vmem:[#allocation8 + $0x34] sm:$0xf]
        %v809 = vld [vmem:[#allocation8 + $0x38] sm:$0xf]
        %v810 = vld [vmem:[#allocation8 + $0x3c] sm:$0xf]
        %v811 = vld [vmem:[#allocation8 + $0x40] sm:$0xf]
        %v812 = vld [vmem:[#allocation8 + $0x44] sm:$0xf]
        %v813 = vld [vmem:[#allocation8 + $0x48] sm:$0xf]
        %v814 = vld [vmem:[#allocation8 + $0x4c] sm:$0xf]
        %v815 = vld [vmem:[#allocation8 + $0x50] sm:$0xf]
        %v816 = vld [vmem:[#allocation8 + $0x54] sm:$0xf]
        %v817 = vld [vmem:[#allocation8 + $0x58] sm:$0xf]
        %v818 = vld [vmem:[#allocation8 + $0x5c] sm:$0xf]
        %v819 = vld [vmem:[#allocation8 + $0x60] sm:$0xf]
        %v820 = vld [vmem:[#allocation8 + $0x64] sm:$0xf]
        %v821 = vld [vmem:[#allocation8 + $0x68] sm:$0xf]
        %v822 = vld [vmem:[#allocation8 + $0x6c] sm:$0xf]
        %v823 = vld [vmem:[#allocation8 + $0x70] sm:$0xf]
        %v824 = vld [vmem:[#allocation8 + $0x74] sm:$0xf]
        %v825 = vld [vmem:[#allocation8 + $0x78] sm:$0xf]
        %v826 = vld [vmem:[#allocation8 + $0x7c] sm:$0xf]
        %v827 = vld [vmem:[#allocation8 + $0x80] sm:$0xf]
        %v828 = vld [vmem:[#allocation8 + $0x84] sm:$0xf]
        %v829 = vld [vmem:[#allocation8 + $0x88] sm:$0xf]
        %v830 = vld [vmem:[#allocation8 + $0x8c] sm:$0xf]
        %v831 = vld [vmem:[#allocation8 + $0x90] sm:$0xf]
        %v832 = vld [vmem:[#allocation8 + $0x94] sm:$0xf]
        %v833 = vld [vmem:[#allocation8 + $0x98] sm:$0xf]
        %v834 = vld [vmem:[#allocation8 + $0x9c] sm:$0xf]
        %v835 = vld [vmem:[#allocation8 + $0xa0] sm:$0xf]
        %v836 = vld [vmem:[#allocation8 + $0xa4] sm:$0xf]
        %v837 = vld [vmem:[#allocation8 + $0xa8] sm:$0xf]
        %v838 = vld [vmem:[#allocation8 + $0xac] sm:$0xf]
        %v839 = vld [vmem:[#allocation8 + $0xb0] sm:$0xf]
        %v840 = vld [vmem:[#allocation8 + $0xb4] sm:$0xf]
        %v841 = vld [vmem:[#allocation8 + $0xb8] sm:$0xf]
        %v842 = vld [vmem:[#allocation8 + $0xbc] sm:$0xf]
        %v891 = vunpack.c.l.b16 %v795
        %v892 = vunpack.c.l.b16 %v796
        %v893 = vunpack.c.l.b16 %v797
        %v894 = vunpack.c.l.b16 %v798
        %v895 = vunpack.c.l.b16 %v799
        %v896 = vunpack.c.l.b16 %v800
        %v897 = vunpack.c.l.b16 %v801
        %v898 = vunpack.c.l.b16 %v802
        %v899 = vunpack.c.l.b16 %v803
        %v900 = vunpack.c.l.b16 %v804
        %v901 = vunpack.c.l.b16 %v805
        %v902 = vunpack.c.l.b16 %v806
        %v903 = vunpack.c.l.b16 %v807
        %v904 = vunpack.c.l.b16 %v808
        %v905 = vunpack.c.l.b16 %v809
        %v906 = vunpack.c.l.b16 %v810
        %v907 = vunpack.c.l.b16 %v811
        %v908 = vunpack.c.l.b16 %v812
        %v909 = vunpack.c.l.b16 %v813
        %v910 = vunpack.c.l.b16 %v814
        %v911 = vunpack.c.l.b16 %v815
        %v912 = vunpack.c.l.b16 %v816
        %v913 = vunpack.c.l.b16 %v817
        %v914 = vunpack.c.l.b16 %v818
        %v915 = vunpack.c.l.b16 %v819
        %v916 = vunpack.c.l.b16 %v820
        %v917 = vunpack.c.l.b16 %v821
        %v918 = vunpack.c.l.b16 %v822
        %v919 = vunpack.c.l.b16 %v823
        %v920 = vunpack.c.l.b16 %v824
        %v921 = vunpack.c.l.b16 %v825
        %v922 = vunpack.c.l.b16 %v826
        %v923 = vunpack.c.l.b16 %v827
        %v924 = vunpack.c.l.b16 %v828
        %v925 = vunpack.c.l.b16 %v829
        %v926 = vunpack.c.l.b16 %v830
        %v927 = vunpack.c.l.b16 %v831
        %v928 = vunpack.c.l.b16 %v832
        %v929 = vunpack.c.l.b16 %v833
        %v930 = vunpack.c.l.b16 %v834
        %v931 = vunpack.c.l.b16 %v835
        %v932 = vunpack.c.l.b16 %v836
        %v933 = vunpack.c.l.b16 %v837
        %v934 = vunpack.c.l.b16 %v838
        %v935 = vunpack.c.l.b16 %v839
        %v936 = vunpack.c.l.b16 %v840
        %v937 = vunpack.c.l.b16 %v841
        %v938 = vunpack.c.l.b16 %v842
        %v939 = vpack.c.b16 %v892, %v891
        %v940 = vpack.c.b16 %v894, %v893
        %v941 = vpack.c.b16 %v896, %v895
        %v942 = vpack.c.b16 %v898, %v897
        %v943 = vpack.c.b16 %v900, %v899
        %v944 = vpack.c.b16 %v902, %v901
        %v945 = vpack.c.b16 %v904, %v903
        %v946 = vpack.c.b16 %v906, %v905
        %v947 = vpack.c.b16 %v908, %v907
        %v948 = vpack.c.b16 %v910, %v909
        %v949 = vpack.c.b16 %v912, %v911
        %v950 = vpack.c.b16 %v914, %v913
        %v951 = vpack.c.b16 %v916, %v915
        %v952 = vpack.c.b16 %v918, %v917
        %v953 = vpack.c.b16 %v920, %v919
        %v954 = vpack.c.b16 %v922, %v921
        %v955 = vpack.c.b16 %v924, %v923
        %v956 = vpack.c.b16 %v926, %v925
        %v957 = vpack.c.b16 %v928, %v927
        %v958 = vpack.c.b16 %v930, %v929
        %v959 = vpack.c.b16 %v932, %v931
        %v960 = vpack.c.b16 %v934, %v933
        %v961 = vpack.c.b16 %v936, %v935
        %v962 = vpack.c.b16 %v938, %v937
        %987 = vmatprep.subr.bf16.mxu0 0
        %988 = vmatpush1.bf16.msra.mxu0 %v939
        %989 = vmatprep.subr.bf16.mxu0 0
        %990 = vmatpush1.bf16.msra.mxu0 %v940
        %991 = vmatprep.subr.bf16.mxu0 0
        %992 = vmatpush1.bf16.msra.mxu0 %v941
        %993 = vmatprep.subr.bf16.mxu0 0
        %994 = vmatpush1.bf16.msra.mxu0 %v942
        %995 = vmatprep.subr.bf16.mxu0 0
        %996 = vmatpush1.bf16.msra.mxu0 %v943
        %997 = vmatprep.subr.bf16.mxu0 0
        %998 = vmatpush1.bf16.msra.mxu0 %v944
        %999 = vmatprep.subr.bf16.mxu0 0
        %1000 = vmatpush1.bf16.msra.mxu0 %v945
        %1001 = vmatprep.subr.bf16.mxu0 0
        %1002 = vmatpush1.bf16.msra.mxu0 %v946
        %1003 = vmatprep.subr.bf16.mxu0 0
        %1004 = vmatpush1.bf16.msra.mxu0 %v947
        %1005 = vmatprep.subr.bf16.mxu0 0
        %1006 = vmatpush1.bf16.msra.mxu0 %v948
        %1007 = vmatprep.subr.bf16.mxu0 0
        %1008 = vmatpush1.bf16.msra.mxu0 %v949
        %1009 = vmatprep.subr.bf16.mxu0 0
        %1010 = vmatpush1.bf16.msra.mxu0 %v950
        %1011 = vmatprep.subr.bf16.mxu0 0
        %1012 = vmatpush1.bf16.msra.mxu0 %v951
        %1013 = vmatprep.subr.bf16.mxu0 0
        %1014 = vmatpush1.bf16.msra.mxu0 %v952
        %1015 = vmatprep.subr.bf16.mxu0 0
        %1016 = vmatpush1.bf16.msra.mxu0 %v953
        %1017 = vmatprep.subr.bf16.mxu0 0
        %1018 = vmatpush1.bf16.msra.mxu0 %v954
        %1019 = vmatprep.mubr.bf16.mxu0 %v776
        %1020 = vmatmul.mubr.bf16.gmra.mrb[0].mxu0 %v775
        %v1021 = vpop.f32.mrb[0].mxu0
        %v1022 = vadd.f32 0.0, %v1021
        %v1023 = vpop.f32.mrb[0].mxu0
        %v1024 = vpop.f32.mrb[0].mxu0
        %v1025 = vadd.f32 0.0, %v1024
        %v1026 = vpop.f32.mrb[0].mxu0
        %1027 = vmatprep.mubr.bf16.mxu0 %v779
        %1028 = vmatmul.mubr.bf16.gmra.mrb[0].mxu0 %v778
        %v1029 = vpop.f32.mrb[0].mxu0
        %v1030 = vadd.f32 0.0, %v1029
        %v1031 = vpop.f32.mrb[0].mxu0
        %v1032 = vpop.f32.mrb[0].mxu0
        %v1033 = vadd.f32 0.0, %v1032
        %v1034 = vpop.f32.mrb[0].mxu0
        %1035 = vmatprep.mubr.bf16.mxu0 %v782
        %1036 = vmatmul.mubr.bf16.gmra.mrb[0].mxu0 %v781
        %v1037 = vpop.f32.mrb[0].mxu0
        %v1038 = vadd.f32 0.0, %v1037
        %v1039 = vpop.f32.mrb[0].mxu0
        %v1040 = vpop.f32.mrb[0].mxu0
        %v1041 = vadd.f32 0.0, %v1040
        %v1042 = vpop.f32.mrb[0].mxu0
        %1043 = vmatprep.mubr.bf16.mxu0 %v785
        %1044 = vmatmul.mubr.bf16.gmra.mrb[0].mxu0 %v784
        %v1045 = vpop.f32.mrb[0].mxu0
        %v1046 = vadd.f32 0.0, %v1045
        %v1047 = vpop.f32.mrb[0].mxu0
        %v1048 = vpop.f32.mrb[0].mxu0
        %v1049 = vadd.f32 0.0, %v1048
        %v1050 = vpop.f32.mrb[0].mxu0
        %1051 = vdwg.mxu0
        %1052 = vmatprep.subr.bf16.mxu0 0
        %1053 = vmatpush1.bf16.msra.mxu0 %v955
        %1054 = vmatprep.subr.bf16.mxu0 0
        %1055 = vmatpush1.bf16.msra.mxu0 %v956
        %1056 = vmatprep.subr.bf16.mxu0 0
        %1057 = vmatpush1.bf16.msra.mxu0 %v957
        %1058 = vmatprep.subr.bf16.mxu0 0
        %1059 = vmatpush1.bf16.msra.mxu0 %v958
        %1060 = vmatprep.subr.bf16.mxu0 0
        %1061 = vmatpush1.bf16.msra.mxu0 %v959
        %1062 = vmatprep.subr.bf16.mxu0 0
        %1063 = vmatpush1.bf16.msra.mxu0 %v960
        %1064 = vmatprep.subr.bf16.mxu0 0
        %1065 = vmatpush1.bf16.msra.mxu0 %v961
        %1066 = vmatprep.subr.bf16.mxu0 0
        %1067 = vmatpush1.bf16.msra.mxu0 %v962
        %1068 = vmatprep.subr.bf16.mxu0 0
        %1069 = vmatpush1.bf16.msra.mxu0 0
        %1070 = vmatprep.subr.bf16.mxu0 0
        %1071 = vmatpush1.bf16.msra.mxu0 0
        %1072 = vmatprep.subr.bf16.mxu0 0
        %1073 = vmatpush1.bf16.msra.mxu0 0
        %1074 = vmatprep.subr.bf16.mxu0 0
        %1075 = vmatpush1.bf16.msra.mxu0 0
        %1076 = vmatprep.subr.bf16.mxu0 0
        %1077 = vmatpush1.bf16.msra.mxu0 0
        %1078 = vmatprep.subr.bf16.mxu0 0
        %1079 = vmatpush1.bf16.msra.mxu0 0
        %1080 = vmatprep.subr.bf16.mxu0 0
        %1081 = vmatpush1.bf16.msra.mxu0 0
        %1082 = vmatprep.subr.bf16.mxu0 0
        %1083 = vmatpush1.bf16.msra.mxu0 0
        %1084 = vmatprep.mubr.bf16.mxu0 0
        %1085 = vmatmul.mubr.bf16.gmra.mrb[0].mxu0 %v777
        %v1086 = vpop.f32.mrb[0].mxu0
        %v1087 = vadd.f32 %v1022, %v1086
        %v1088 = vpop.f32.mrb[0].mxu0
        %v1089 = vpop.f32.mrb[0].mxu0
        %v1090 = vadd.f32 %v1025, %v1089
        %v1091 = vpop.f32.mrb[0].mxu0
        %1092 = vmatprep.mubr.bf16.mxu0 0
        %1093 = vmatmul.mubr.bf16.gmra.mrb[0].mxu0 %v780
        %v1094 = vpop.f32.mrb[0].mxu0
        %v1095 = vadd.f32 %v1030, %v1094
        %v1096 = vpop.f32.mrb[0].mxu0
        %v1097 = vpop.f32.mrb[0].mxu0
        %v1098 = vadd.f32 %v1033, %v1097
        %v1099 = vpop.f32.mrb[0].mxu0
        %1100 = vmatprep.mubr.bf16.mxu0 0
        %1101 = vmatmul.mubr.bf16.gmra.mrb[0].mxu0 %v783
        %v1102 = vpop.f32.mrb[0].mxu0
        %v1103 = vadd.f32 %v1038, %v1102
        %v1104 = vpop.f32.mrb[0].mxu0
        %v1105 = vpop.f32.mrb[0].mxu0
        %v1106 = vadd.f32 %v1041, %v1105
        %v1107 = vpop.f32.mrb[0].mxu0
        %1108 = vmatprep.mubr.bf16.mxu0 0
        %1109 = vmatmul.mubr.bf16.gmra.mrb[0].mxu0 %v786
        %v1110 = vpop.f32.mrb[0].mxu0
        %v1111 = vadd.f32 %v1046, %v1110
        %v1112 = vpop.f32.mrb[0].mxu0
        %v1113 = vpop.f32.mrb[0].mxu0
        %v1114 = vadd.f32 %v1049, %v1113
        %v1115 = vpop.f32.mrb[0].mxu0
        %1116 = vdwg.mxu0
        %v1117 = vadd.f32 %v787, %v1087
        %v1118 = vadd.f32 %v788, %v1090
        %v1119 = vadd.f32 %v789, %v1095
        %v1120 = vadd.f32 %v790, %v1098
        %v1121 = vadd.f32 %v791, %v1103
        %v1122 = vadd.f32 %v792, %v1106
        %v1123 = vadd.f32 %v793, %v1111
        %v1124 = vadd.f32 %v794, %v1114
        %1125 = vst [vmem:[#allocation2] sm:$0xff] %v1117
        %1126 = vst [vmem:[#allocation2 + $0x8] sm:$0xff] %v1118
        %1127 = vst [vmem:[#allocation2 + $0x10] sm:$0xff] %v1119
        %1128 = vst [vmem:[#allocation2 + $0x18] sm:$0xff] %v1120
        %1129 = vst [vmem:[#allocation2 + $0x20] sm:$0xff] %v1121
        %1130 = vst [vmem:[#allocation2 + $0x28] sm:$0xff] %v1122
        %1131 = vst [vmem:[#allocation2 + $0x30] sm:$0xff] %v1123
        %1132 = vst [vmem:[#allocation2 + $0x38] sm:$0xff] %v1124
        // Predicated region
        $region57: #{tpu_custom_call.1} parent=39 // pred_check
          %p1133 = pneg %p328
        $region58: #{tpu_custom_call.1} parent=39 // pred_check_branch
          %1135 = sbr.rel (%p1133) target = $region60
        $region59: #{tpu_custom_call.1} parent=39 // pred_region
          %v1136 = vld [vmem:[#allocation2] sm:$0xff]
          %v1137 = vld [vmem:[#allocation2 + $0x8] sm:$0xff]
          %v1138 = vld [vmem:[#allocation2 + $0x10] sm:$0xff]
          %v1139 = vld [vmem:[#allocation2 + $0x18] sm:$0xff]
          %v1140 = vld [vmem:[#allocation2 + $0x20] sm:$0xff]
          %v1141 = vld [vmem:[#allocation2 + $0x28] sm:$0xff]
          %v1142 = vld [vmem:[#allocation2 + $0x30] sm:$0xff]
          %v1143 = vld [vmem:[#allocation2 + $0x38] sm:$0xff]
          %v1144 = vld [vmem:[%s4] sm:$0x1]
          %v1146 = vlaneseq
          %v1147 = vshrl.u32 %v1146, 7
          %v1148 = vsub.s32 0, %v1147
          %v1149 = vrot.slane %v1144, %v1148
          %v1151 = vadd.f32 %v1136, %v1149
          %v1152 = vadd.f32 %v1137, %v1149
          %v1153 = vadd.f32 %v1138, %v1149
          %v1154 = vadd.f32 %v1139, %v1149
          %v1155 = vadd.f32 %v1140, %v1149
          %v1156 = vadd.f32 %v1141, %v1149
          %v1157 = vadd.f32 %v1142, %v1149
          %v1158 = vadd.f32 %v1143, %v1149
          %1159 = vst [vmem:[%s313] sm:$0xff] %v1151
          %1160 = vst [vmem:[%s313 + $0x8] sm:$0xff] %v1152
          %1161 = vst [vmem:[%s313 + $0x10] sm:$0xff] %v1153
          %1162 = vst [vmem:[%s313 + $0x18] sm:$0xff] %v1154
          %1163 = vst [vmem:[%s313 + $0x20] sm:$0xff] %v1155
          %1164 = vst [vmem:[%s313 + $0x28] sm:$0xff] %v1156
          %1165 = vst [vmem:[%s313 + $0x30] sm:$0xff] %v1157
          %1166 = vst [vmem:[%s313 + $0x38] sm:$0xff] %v1158
        $region60: #{tpu_custom_call.1} parent=39 // pred_fallthru
          _
        %s1167 = sand.u32 %s168, 1
        %s1168 = scalar_lea.sflag [#allocation5], %s1167
        %s1169 = sand.u32 %s168, 1
        %s1170 = smul.addr %s1169, 64
        %s1171 = scalar_lea.vmem [#allocation9], %s1170
        // Predicated region
        $region61: #{tpu_custom_call.1} parent=39 // pred_check
          %p1172 = pneg %p178
        $region62: #{tpu_custom_call.1} parent=39 // pred_check_branch
          %1174 = sbr.rel (%p1172) target = $region64
        $region63: #{tpu_custom_call.1} parent=39 // pred_region
          %s1175 = smul.u32 8, %s27
          %s1177 = ssub.s32 1024, 1024
          %1178 = vsyncadd %s1168, %s1177
          %s1179 = smul.addr %s1175, 128
          %s1180 = scalar_lea.hbm %s5, %s1179
          %s1181 = sshll.u32 %s1171, 4
          %s1182 = int_to_ptr.vmem [resolvable:$true] %s1181
          %1187 = dma.vmem_to_hbm [thread:$0]  %s1182, 1024, %s1180, %s1168, 128, 128, 8
        $region64: #{tpu_custom_call.1} parent=39 // pred_fallthru
          _
      $region40: #{tpu_custom_call.1} parent=5 // pred_fallthru
        _
      %p1188 = scmp.le.s32.totalorder 2, %s18
      // Predicated region
      $region65: #{tpu_custom_call.1} parent=5 // pred_check
        %p1189 = pneg %p1188
      $region66: #{tpu_custom_call.1} parent=5 // pred_check_branch
        %1191 = sbr.rel (%p1189) target = $region68
      $region67: #{tpu_custom_call.1} parent=5 // pred_region
        %s1192 = ssub.s32 %s18, 2
        // Predicated region
        $region69: #{tpu_custom_call.1} parent=67 // pred_check
          %p1193 = pneg %p184
        $region70: #{tpu_custom_call.1} parent=67 // pred_check_branch
          %1195 = sbr.rel (%p1193) target = $region72
        $region71: #{tpu_custom_call.1} parent=67 // pred_region
          %s1196 = sand.u32 %s169, 1
          %s1197 = scalar_lea.sflag [#allocation5], %s1196
          %s1198 = sand.u32 %s169, 1
          %s1199 = smul.addr %s1198, 64
          %s1200 = scalar_lea.vmem [#allocation9], %s1199
          %1201 = dma.done %s1197, 1024
        $region72: #{tpu_custom_call.1} parent=67 // pred_fallthru
          _
      $region68: #{tpu_custom_call.1} parent=5 // pred_fallthru
        _
    $region6: #{tpu_custom_call.1} parent=1 // loop_footer
      %s22 = sadd.s32 1, %s18
    $region7: #{tpu_custom_call.1} parent=1 // loop_footer_branch
      %17 = sbr.rel target = $region3
    $region8: #{tpu_custom_call.1} parent=1 // loop_exit
      _
    %1202 = vsyncpa [#allocation4], 1
    %s1203 = scalar_lea.sflag [#allocation4], 1
    %1204 = vsyncpa %s1203, 1
    %1205 = vsyncpa [#allocation7], 1
    %1206 = vsyncpa [#allocation5], 1
    %s1207 = scalar_lea.sflag [#allocation5], 1
    %1208 = vsyncpa %s1207, 1

</llo_original>
